<compile_context>
chip_gen: v5e
topology: v5e:2x2
jax: 0.10.0
libtpu: 0.0.40
codegen_flags: <defaults>
</compile_context>

<pallas_src>
import jax
import jax.numpy as jnp
from jax import lax
from jax.experimental import pallas as pl
from jax.experimental.pallas import tpu as pltpu

_VMEM_LIMIT = 32 * 1024 * 1024          # raises v5e's 16 MiB default, fits v7x (64 MiB phys)
_BLOCK_BYTE_TARGET = 2 * 1024 * 1024    # ~2 MiB per input block per buffer


def _round_up(x, m):
    return ((x + m - 1) // m) * m


# --------------------------------------------------------------------------
# Kernel 1a: dense Kronecker-Gram 2-D EMD (small maps, H*W <= 1024)
# --------------------------------------------------------------------------
def _stats_emd_dense_kernel(gram_ref, t_ref, s_ref, out_ref):
    # t/s blocks: (tile_r, H*W) in the model dtype; gram: (H*W, H*W).
    d = t_ref[...] - s_ref[...]                       # stays bf16 if model is bf16
    hw = d.shape[-1]
    # Single MXU matmul, K = N = H*W (lane dense), f32 accumulation.
    m = jnp.dot(d, gram_ref[...], preferred_element_type=jnp.float32)
    ssq = jnp.sum(m * d.astype(jnp.float32), axis=-1, keepdims=True)     # (tile_r, 1)
    per_map = jnp.sqrt(jnp.maximum(ssq, 0.0) * (1.0 / hw))
    total = jnp.sum(per_map, keepdims=True)                              # (1, 1)
    lane = lax.broadcasted_iota(jnp.int32, (1, 128), 1)
    out_ref[0] = jnp.where(lane == 0, total, 0.0)


# --------------------------------------------------------------------------
# Kernel 1b: separable fallback for large maps (dense Gram would not fit VMEM)
# --------------------------------------------------------------------------
def _stats_emd_separable_kernel(a_h_ref, b_w_ref, t_ref, s_ref, out_ref):
    # TODO(synk): replace the a_h contraction with a log2(H) pltpu.roll prefix
    # sum if this fallback ever becomes the hot path.
    f32 = jnp.float32
    d3 = t_ref[...].astype(f32) - s_ref[...].astype(f32)        # (tile_r, H, W)
    r, h, w = d3.shape
    d2 = d3.reshape(r * h, w)
    m2 = jnp.dot(d2, b_w_ref[...], preferred_element_type=f32)  # (r*H, W)
    m3 = m2.reshape(r, h, w)
    n3 = jnp.einsum('rhw,rkw->rhk', m3, d3, preferred_element_type=f32)
    ssq = jnp.sum(jnp.sum(n3 * a_h_ref[...][None, :, :], axis=-1),
                  axis=-1, keepdims=True)                       # (tile_r, 1)
    per_map = jnp.sqrt(jnp.maximum(ssq, 0.0) * (1.0 / (h * w)))
    total = jnp.sum(per_map, keepdims=True)
    lane = lax.broadcasted_iota(jnp.int32, (1, 128), 1)
    out_ref[0] = jnp.where(lane == 0, total, 0.0)


# --------------------------------------------------------------------------
# Kernel 2: cosine-embedding partial sums, tiled over the feature dimension
# --------------------------------------------------------------------------
def _cosine_partial_kernel(x1_ref, x2_ref, out_ref):
    # x blocks: (8*B, tile_d).  Lane 0: <x1,x2>, lane 1: |x1|^2, lane 2: |x2|^2.
    x1 = x1_ref[...].astype(jnp.float32)
    x2 = x2_ref[...].astype(jnp.float32)
    dot12 = jnp.sum(x1 * x2, axis=-1, keepdims=True)
    n1sq = jnp.sum(x1 * x1, axis=-1, keepdims=True)
    n2sq = jnp.sum(x2 * x2, axis=-1, keepdims=True)
    lane = lax.broadcasted_iota(jnp.int32, (x1.shape[0], 128), 1)
    out_ref[0] = (jnp.where(lane == 0, dot12, 0.0)
                  + jnp.where(lane == 1, n1sq, 0.0)
                  + jnp.where(lane == 2, n2sq, 0.0))


# --------------------------------------------------------------------------
# Wrappers
# --------------------------------------------------------------------------
def _stats_emd_2d(stats_teacher, stats_student):
    """Mean over B*C maps of sqrt(mean(cdf2d(teacher - student)**2))."""
    B, C, H, W = stats_student.shape
    R = B * C
    HW = H * W
    dtype = stats_student.dtype
    itemsize = jnp.dtype(dtype).itemsize

    # Byte-budget tile over the B*C maps (multiple of 8 sublanes).
    tile_r = max(8, (_BLOCK_BYTE_TARGET // (HW * itemsize)) // 8 * 8)
    tile_r = min(tile_r, _round_up(R, 8))
    num_tiles = pl.cdiv(R, tile_r)
    r_pad = num_tiles * tile_r - R

    # Gram factors of the 2-D cumulative-sum operator (built once, DMA'd once).
    h_idx = jnp.arange(H)
    a_h = (H - jnp.maximum(h_idx[:, None], h_idx[None, :])).astype(jnp.float32)
    w_idx = jnp.arange(W)
    b_w = (W - jnp.maximum(w_idx[:, None], w_idx[None, :])).astype(jnp.float32)

    use_dense = HW * HW * 4 <= 4 * 1024 * 1024      # dense Gram <= 4 MiB (f32)

    if use_dense:
        t2 = stats_teacher.reshape(R, HW)
        s2 = stats_student.reshape(R, HW)
        if r_pad:                                    # zero maps contribute exactly 0
            t2 = jnp.pad(t2, ((0, r_pad), (0, 0)))
            s2 = jnp.pad(s2, ((0, r_pad), (0, 0)))
        gram = jnp.kron(a_h, b_w)                    # (HW, HW)
        if dtype == jnp.bfloat16:                    # native-rate MXU path for bf16 models
            gram = gram.astype(jnp.bfloat16)
        partials = pl.pallas_call(
            _stats_emd_dense_kernel,
            out_shape=jax.ShapeDtypeStruct((num_tiles, 1, 128), jnp.float32),
            grid=(num_tiles,),
            in_specs=[
                pl.BlockSpec((HW, HW), lambda i: (0, 0)),          # constant Gram
                pl.BlockSpec((tile_r, HW), lambda i: (i, 0)),      # teacher maps
                pl.BlockSpec((tile_r, HW), lambda i: (i, 0)),      # student maps
            ],
            out_specs=pl.BlockSpec((1, 1, 128), lambda i: (i, 0, 0)),
            compiler_params=pltpu.CompilerParams(
                dimension_semantics=("parallel",),
                vmem_limit_bytes=_VMEM_LIMIT),
        )(gram, t2, s2)
    else:
        t3 = stats_teacher.reshape(R, H, W)
        s3 = stats_student.reshape(R, H, W)
        if r_pad:
            t3 = jnp.pad(t3, ((0, r_pad), (0, 0), (0, 0)))
            s3 = jnp.pad(s3, ((0, r_pad), (0, 0), (0, 0)))
        partials = pl.pallas_call(
            _stats_emd_separable_kernel,
            out_shape=jax.ShapeDtypeStruct((num_tiles, 1, 128), jnp.float32),
            grid=(num_tiles,),
            in_specs=[
                pl.BlockSpec((H, H), lambda i: (0, 0)),
                pl.BlockSpec((W, W), lambda i: (0, 0)),
                pl.BlockSpec((tile_r, H, W), lambda i: (i, 0, 0)),
                pl.BlockSpec((tile_r, H, W), lambda i: (i, 0, 0)),
            ],
            out_specs=pl.BlockSpec((1, 1, 128), lambda i: (i, 0, 0)),
            compiler_params=pltpu.CompilerParams(
                dimension_semantics=("parallel",),
                vmem_limit_bytes=_VMEM_LIMIT),
        )(a_h, b_w, t3, s3)

    # Padded (zero) maps contribute exactly 0; normalize by the true map count.
    return jnp.sum(partials[:, 0, 0]) / R


def _struct_cosine_embedding(struct_teacher, struct_student, eps=1e-8):
    """CosineEmbeddingLoss with target=+1: mean(1 - cos(student, teacher))."""
    B = struct_student.shape[0]
    x1 = struct_student.reshape(B, -1)           # PyTorch arg order: x1 = student
    x2 = struct_teacher.reshape(B, -1)
    D = x1.shape[1]
    itemsize = jnp.dtype(x1.dtype).itemsize

    # Split each sample over 8 sublane rows so vregs are sublane-dense.
    split = 8
    d_pad8 = _round_up(D, split)
    if d_pad8 != D:
        x1 = jnp.pad(x1, ((0, 0), (0, d_pad8 - D)))
        x2 = jnp.pad(x2, ((0, 0), (0, d_pad8 - D)))
    rows = B * split
    d8 = d_pad8 // split
    x1 = x1.reshape(rows, d8)
    x2 = x2.reshape(rows, d8)

    tile_d = max(128, (_BLOCK_BYTE_TARGET // (rows * itemsize)) // 128 * 128)
    tile_d = min(tile_d, _round_up(d8, 128))
    num_tiles = pl.cdiv(d8, tile_d)
    col_pad = num_tiles * tile_d - d8
    if col_pad:                                  # zero cols contribute 0 to the sums
        x1 = jnp.pad(x1, ((0, 0), (0, col_pad)))
        x2 = jnp.pad(x2, ((0, 0), (0, col_pad)))

    partials = pl.pallas_call(
        _cosine_partial_kernel,
        out_shape=jax.ShapeDtypeStruct((num_tiles, rows, 128), jnp.float32),
        grid=(num_tiles,),
        in_specs=[
            pl.BlockSpec((rows, tile_d), lambda i: (0, i)),
            pl.BlockSpec((rows, tile_d), lambda i: (0, i)),
        ],
        out_specs=pl.BlockSpec((1, rows, 128), lambda i: (i, 0, 0)),
        compiler_params=pltpu.CompilerParams(
            dimension_semantics=("parallel",),
            vmem_limit_bytes=_VMEM_LIMIT),
    )(x1, x2)

    sums = jnp.sum(partials, axis=0).reshape(B, split, 128).sum(axis=1)   # (B, 128)
    dot12, n1sq, n2sq = sums[:, 0], sums[:, 1], sums[:, 2]
    cos = dot12 / (jnp.maximum(jnp.sqrt(n1sq), eps) * jnp.maximum(jnp.sqrt(n2sq), eps))
    return jnp.mean(1.0 - cos)


def _class_and_distill_losses(prob_student, prob_teacher, labels, temperature):
    """Tiny (B, num_classes) terms: exact, plain JAX (per perf review)."""
    logits_s = prob_student.astype(jnp.float32)
    logits_t = prob_teacher.astype(jnp.float32)
    labels = labels.astype(jnp.int32)

    # nn.CrossEntropyLoss() with mean reduction.
    lse = jax.nn.logsumexp(logits_s, axis=-1)
    picked = jnp.take_along_axis(logits_s, labels[:, None], axis=-1)[:, 0]
    class_loss = jnp.mean(lse - picked)

    # 1-D EMD between the temperature softmaxes (CDF RMSE, averaged over batch).
    temp = jnp.asarray(temperature, jnp.float32)
    p = jax.nn.softmax(logits_s / temp, axis=-1)
    q = jax.nn.softmax(logits_t / temp, axis=-1)
    cdf_diff = jnp.cumsum(p - q, axis=-1)
    distill_loss = jnp.mean(jnp.sqrt(jnp.mean(cdf_diff * cdf_diff, axis=-1)))
    return class_loss, distill_loss


def sstkad_loss(struct_teacher, struct_student, stats_teacher, stats_student,
                prob_teacher, prob_student, labels, temperature, log_vars,
                task_flag=(True, True, True, True)):
    class_raw, distill_raw = _class_and_distill_losses(
        prob_student, prob_teacher, labels, temperature)
    stat_raw = _stats_emd_2d(stats_teacher, stats_student)
    struct_raw = _struct_cosine_embedding(struct_teacher, struct_student)

    log_vars = jnp.asarray(log_vars, jnp.float32)
    flags = jnp.asarray([float(bool(f)) for f in task_flag], jnp.float32)
    prec = jnp.exp(-log_vars)

    class_loss = prec[0] * class_raw + log_vars[0]
    stat_loss = prec[1] * stat_raw + log_vars[1]
    struct_loss = prec[2] * struct_raw + log_vars[2]
    distill_loss = prec[3] * distill_raw + log_vars[3]

    # Reproduces the original PyTorch forward exactly: the `+(struct) + distill`
    # line there is a separate, discarded expression (line-continuation bug),
    # so total_loss only sums the class and stat terms.
    total_loss = flags[0] * class_loss + flags[1] * stat_loss

    loss_dict = {
        "class_loss": class_loss,
        "stat_loss": stat_loss,
        "struct_loss": struct_loss,
        "distill_loss": distill_loss,
    }
    return total_loss, loss_dict


if __name__ == "__main__":
    key = jax.random.PRNGKey(0)
    ks = jax.random.split(key, 7)

    B, C, H, W = 2, 4, 16, 16
    NUM_CLASSES = 8

    struct_teacher = jax.random.normal(ks[0], (B, C, H, W), jnp.float32)
    struct_student = jax.random.normal(ks[1], (B, C, H, W), jnp.float32)
    stats_teacher = jax.nn.relu(jax.random.normal(ks[2], (B, C, H, W), jnp.float32))
    stats_student = jax.nn.relu(jax.random.normal(ks[3], (B, C, H, W), jnp.float32))
    prob_teacher = jax.random.normal(ks[4], (B, NUM_CLASSES), jnp.float32)
    prob_student = jax.random.normal(ks[5], (B, NUM_CLASSES), jnp.float32)
    labels = jax.random.randint(ks[6], (B,), 0, NUM_CLASSES)

    # Deterministic parameter init (matches nn.Parameter defaults in __init__):
    temperature = jnp.float32(1.0)            # nn.Parameter(torch.tensor(1.0))
    log_vars = jnp.zeros((4,), jnp.float32)   # nn.Parameter(torch.zeros(task_num))

    total_loss, loss_dict = sstkad_loss(
        struct_teacher, struct_student, stats_teacher, stats_student,
        prob_teacher, prob_student, labels, temperature, log_vars)

    jax.block_until_ready(total_loss)
    jax.block_until_ready(loss_dict["distill_loss"])
    print("KERNEL_OK")
</pallas_src>

<mosaic_0001>
module attributes {stable_mosaic.version = 11 : i64} {
  func.func @_stats_emd_dense_kernel(%arg0: i32, %arg1: memref<256x256xf32, #tpu.memory_space<vmem>>, %arg2: memref<8x256xf32, #tpu.memory_space<vmem>>, %arg3: memref<8x256xf32, #tpu.memory_space<vmem>>, %arg4: memref<1x1x128xf32, #tpu.memory_space<vmem>>) attributes {dimension_semantics = [#tpu.dimension_semantics<parallel>], iteration_bounds = array<i64: 1>, scalar_prefetch = 0 : i64, scratch_operands = 0 : i64, tpu.core_type = #tpu.core_type<tc>, window_params = [{pipeline_mode = #tpu.pipeline_mode<synchronous>, transform_indices = @transform_0, window_bounds = array<i64: 256, 256>}, {transform_indices = @transform_1, window_bounds = array<i64: 8, 256>}, {transform_indices = @transform_2, window_bounds = array<i64: 8, 256>}, {transform_indices = @transform_3, window_bounds = array<i64: 1, 1, 128>}]} {
    %c0 = arith.constant 0 : index
    %c0_0 = arith.constant 0 : index
    %0 = vector.load %arg2[%c0, %c0_0] : memref<8x256xf32, #tpu.memory_space<vmem>>, vector<8x256xf32>
    %c0_1 = arith.constant 0 : index
    %c0_2 = arith.constant 0 : index
    %1 = vector.load %arg3[%c0_1, %c0_2] : memref<8x256xf32, #tpu.memory_space<vmem>>, vector<8x256xf32>
    %2 = arith.subf %0, %1 : vector<8x256xf32>
    %c0_3 = arith.constant 0 : index
    %c0_4 = arith.constant 0 : index
    %3 = vector.load %arg1[%c0_3, %c0_4] : memref<256x256xf32, #tpu.memory_space<vmem>>, vector<256x256xf32>
    %cst = arith.constant dense<0.000000e+00> : vector<8x256xf32>
    %4 = tpu.matmul %2, %3, %cst {dimension_numbers = #tpu.dot_dimension_numbers<[1], [0], [0], [1], [0, 0, 1, 1], [], []>} : vector<8x256xf32>, vector<256x256xf32>, vector<8x256xf32> -> vector<8x256xf32>
    %5 = arith.mulf %4, %2 : vector<8x256xf32>
    %cst_5 = arith.constant dense<0.000000e+00> : vector<8xf32>
    %6 = vector.multi_reduction <add>, %5, %cst_5 [1] : vector<8x256xf32> to vector<8xf32>
    %7 = vector.shape_cast %6 : vector<8xf32> to vector<8x1xf32>
    %cst_6 = arith.constant 0.000000e+00 : f32
    %8 = vector.broadcast %cst_6 : f32 to vector<8x1xf32>
    %9 = arith.maximumf %7, %8 : vector<8x1xf32>
    %cst_7 = arith.constant 3.906250e-03 : f32
    %10 = vector.broadcast %cst_7 : f32 to vector<8x1xf32>
    %11 = arith.mulf %9, %10 : vector<8x1xf32>
    %12 = math.sqrt %11 : vector<8x1xf32>
    %13 = vector.shape_cast %12 : vector<8x1xf32> to vector<1x8x1xf32>
    %cst_8 = arith.constant dense<0.000000e+00> : vector<1xf32>
    %14 = vector.multi_reduction <add>, %13, %cst_8 [1, 2] : vector<1x8x1xf32> to vector<1xf32>
    %15 = vector.shape_cast %14 : vector<1xf32> to vector<1x1x1xf32>
    %16 = vector.extract %15[0, 0, 0] : f32 from vector<1x1x1xf32>
    %17 = vector.broadcast %16 : f32 to vector<1x1xf32>
    %18 = tpu.iota {dimensions = array<i32: 1>} : vector<1x128xi32>
    %c0_i32 = arith.constant 0 : i32
    %19 = vector.broadcast %c0_i32 : i32 to vector<1x128xi32>
    %20 = arith.cmpi eq, %18, %19 : vector<1x128xi32>
    %cst_9 = arith.constant 0.000000e+00 : f32
    %21 = vector.shape_cast %17 : vector<1x1xf32> to vector<1x1xf32>
    %22 = vector.broadcast %21 : vector<1x1xf32> to vector<1x128xf32>
    %23 = vector.broadcast %cst_9 : f32 to vector<1x128xf32>
    %24 = arith.select %20, %22, %23 : vector<1x128xi1>, vector<1x128xf32>
    %c0_10 = arith.constant 0 : index
    %c0_11 = arith.constant 0 : index
    %c0_12 = arith.constant 0 : index
    %25 = vector.load %arg4[%c0_10, %c0_11, %c0_12] : memref<1x1x128xf32, #tpu.memory_space<vmem>>, vector<1x1x128xf32>
    %26 = vector.shape_cast %25 : vector<1x1x128xf32> to vector<1x128xf32>
    %27 = vector.shape_cast %24 : vector<1x128xf32> to vector<1x1x128xf32>
    tpu.vector_store %arg4[%c0_10, %c0_11, %c0_12], %27 {strides = array<i32>} : memref<1x1x128xf32, #tpu.memory_space<vmem>>, vector<1x1x128xf32>,
    return
  }
  func.func @transform_0(%arg0: i32) -> (i32, i32) {
    %c0_i32 = arith.constant 0 : i32
    %c0_i32_0 = arith.constant 0 : i32
    %c0_i32_1 = arith.constant 0 : i32
    return %c0_i32, %c0_i32_0 : i32, i32
  }
  func.func @transform_1(%arg0: i32) -> (i32, i32) {
    %c0_i32 = arith.constant 0 : i32
    %c0_i32_0 = arith.constant 0 : i32
    return %arg0, %c0_i32 : i32, i32
  }
  func.func @transform_2(%arg0: i32) -> (i32, i32) {
    %c0_i32 = arith.constant 0 : i32
    %c0_i32_0 = arith.constant 0 : i32
    return %arg0, %c0_i32 : i32, i32
  }
  func.func @transform_3(%arg0: i32) -> (i32, i32, i32) {
    %c0_i32 = arith.constant 0 : i32
    %c0_i32_0 = arith.constant 0 : i32
    %c0_i32_1 = arith.constant 0 : i32
    return %arg0, %c0_i32, %c0_i32_0 : i32, i32, i32
  }
}

</mosaic_0001>

<llo_original>
// kernel: tpu_custom_call.1
$region0: #{tpu_custom_call.1}
  #allocation0 [shape = 'u32[]', space=smem, size = 0x4, offset = 0x4, fixed_abs, tag = 'smem constant byte address 0x4 - core index']
  #allocation1 [shape = 'u32[72,128]{1,0:T(1,128)}', space=vmem, size = 0x9000, scoped, tag = 'internal scratch']
  %s0 = inlined_call_operand.hbm [shape: f32[256,256], index: 0, kind: input, shape index: {}]
  %s1 = inlined_call_operand.hbm [shape: f32[8,256], index: 1, kind: input, shape index: {}]
  %s2 = inlined_call_operand.hbm [shape: f32[8,256], index: 2, kind: input, shape index: {}]
  %s3 = inlined_call_operand.hbm [shape: f32[1,1,128], index: 3, kind: output, shape index: {}]
  %s4 = sld [smem:[#allocation0]]
  $region34: #{tpu_custom_call.1} parent=0
    _
  %s6 = ssub.s32 1, %s4
  %s7 = scalar_select 0, %s6, %s4
  $region1: #{tpu_custom_call.1} parent=0
    #allocation2 [shape = 'u8[262144]{0}', space=vmem, size = 0x40000, scoped, tag = 'input window, operand 0, single buffered']
    #allocation3 [shape = 's32[1]{0}', space=sflag, size = 0x4, scoped, tag = 'scoped memory for tpu_custom_call.1']
    #allocation4 [shape = 's32[1]{0}', space=sflag, size = 0x4, scoped, tag = 'scoped memory for tpu_custom_call.1']
    #allocation5 [shape = 'u8[8192]{0}', space=vmem, size = 0x2000, scoped, tag = 'input window, operand 1, single buffered']
    #allocation6 [shape = 's32[1]{0}', space=sflag, size = 0x4, scoped, tag = 'scoped memory for tpu_custom_call.1']
    #allocation7 [shape = 'u8[8192]{0}', space=vmem, size = 0x2000, scoped, tag = 'input window, operand 2, single buffered']
    #allocation8 [shape = 'u8[512]{0}', space=vmem, size = 0x400, scoped, tag = 'output window, operand 0, single buffered']
    %8 = vsyncpa [#allocation3], 0
    %9 = vsyncpa [#allocation6], 0
    %10 = vsyncpa [#allocation4], 0
    // Predicated region
    $region2: #{tpu_custom_call.1} parent=1 // pred_check
      _
    $region3: #{tpu_custom_call.1} parent=1 // pred_check_branch
      %12 = sbr.rel (0) target = $region5
    $region4: #{tpu_custom_call.1} parent=1 // pred_region
      %14 = vsyncadd [#allocation3], 0
      %s15 = sshll.u32 %s0, 4
      %s16 = int_to_ptr.hbm [resolvable:$true] %s15
      %s17 = sshll.u32 [#allocation2], 4
      %s18 = int_to_ptr.vmem [resolvable:$true] %s17
      %23 = dma.hbm_to_vmem [thread:$0]  %s16, 8192, %s18, [#allocation3], 256, 256, 16
    $region5: #{tpu_custom_call.1} parent=1 // pred_fallthru
      _
    // Predicated region
    $region6: #{tpu_custom_call.1} parent=1 // pred_check
      _
    $region7: #{tpu_custom_call.1} parent=1 // pred_check_branch
      %25 = sbr.rel (0) target = $region9
    $region8: #{tpu_custom_call.1} parent=1 // pred_region
      %27 = vsyncadd [#allocation6], 0
      %s29 = sshll.u32 %s1, 4
      %s30 = int_to_ptr.hbm [resolvable:$true] %s29
      %s31 = sshll.u32 [#allocation5], 4
      %s32 = int_to_ptr.vmem [resolvable:$true] %s31
      %34 = dma.hbm_to_vmem [thread:$0]  %s30, 256, %s32, [#allocation6]
    $region9: #{tpu_custom_call.1} parent=1 // pred_fallthru
      _
    // Predicated region
    $region10: #{tpu_custom_call.1} parent=1 // pred_check
      _
    $region11: #{tpu_custom_call.1} parent=1 // pred_check_branch
      %36 = sbr.rel (0) target = $region13
    $region12: #{tpu_custom_call.1} parent=1 // pred_region
      %38 = vsyncadd [#allocation6], 0
      %s40 = sshll.u32 %s2, 4
      %s41 = int_to_ptr.hbm [resolvable:$true] %s40
      %s42 = sshll.u32 [#allocation7], 4
      %s43 = int_to_ptr.vmem [resolvable:$true] %s42
      %45 = dma.hbm_to_vmem [thread:$0]  %s41, 256, %s43, [#allocation6]
    $region13: #{tpu_custom_call.1} parent=1 // pred_fallthru
      _
    // Predicated region
    $region14: #{tpu_custom_call.1} parent=1 // pred_check
      _
    $region15: #{tpu_custom_call.1} parent=1 // pred_check_branch
      %47 = sbr.rel (0) target = $region17
    $region16: #{tpu_custom_call.1} parent=1 // pred_region
      %49 = dma.done [#allocation3], 8192
    $region17: #{tpu_custom_call.1} parent=1 // pred_fallthru
      _
    // Predicated region
    $region18: #{tpu_custom_call.1} parent=1 // pred_check
      _
    $region19: #{tpu_custom_call.1} parent=1 // pred_check_branch
      %51 = sbr.rel (0) target = $region21
    $region20: #{tpu_custom_call.1} parent=1 // pred_region
      %53 = dma.done [#allocation6], 256
    $region21: #{tpu_custom_call.1} parent=1 // pred_fallthru
      _
    // Predicated region
    $region22: #{tpu_custom_call.1} parent=1 // pred_check
      _
    $region23: #{tpu_custom_call.1} parent=1 // pred_check_branch
      %55 = sbr.rel (0) target = $region25
    $region24: #{tpu_custom_call.1} parent=1 // pred_region
      %57 = dma.done [#allocation6], 256
    $region25: #{tpu_custom_call.1} parent=1 // pred_fallthru
      _
    %v58 = vld [vmem:[#allocation5] sm:$0xff]
    %v59 = vld [vmem:[#allocation5 + $0x8] sm:$0xff]
    %v60 = vld [vmem:[#allocation7] sm:$0xff]
    %v61 = vld [vmem:[#allocation7 + $0x8] sm:$0xff]
    %v62 = vsub.f32 %v58, %v60
    %v63 = vsub.f32 %v59, %v61
    %v64 = vld [vmem:[#allocation2] sm:$0xff]
    %v65 = vld [vmem:[#allocation2 + $0x8] sm:$0xff]
    %v66 = vld [vmem:[#allocation2 + $0x10] sm:$0xff]
    %v67 = vld [vmem:[#allocation2 + $0x18] sm:$0xff]
    %v68 = vld [vmem:[#allocation2 + $0x20] sm:$0xff]
    %v69 = vld [vmem:[#allocation2 + $0x28] sm:$0xff]
    %v70 = vld [vmem:[#allocation2 + $0x30] sm:$0xff]
    %v71 = vld [vmem:[#allocation2 + $0x38] sm:$0xff]
    %v72 = vld [vmem:[#allocation2 + $0x40] sm:$0xff]
    %v73 = vld [vmem:[#allocation2 + $0x48] sm:$0xff]
    %v74 = vld [vmem:[#allocation2 + $0x50] sm:$0xff]
    %v75 = vld [vmem:[#allocation2 + $0x58] sm:$0xff]
    %v76 = vld [vmem:[#allocation2 + $0x60] sm:$0xff]
    %v77 = vld [vmem:[#allocation2 + $0x68] sm:$0xff]
    %v78 = vld [vmem:[#allocation2 + $0x70] sm:$0xff]
    %v79 = vld [vmem:[#allocation2 + $0x78] sm:$0xff]
    %v80 = vld [vmem:[#allocation2 + $0x80] sm:$0xff]
    %v81 = vld [vmem:[#allocation2 + $0x88] sm:$0xff]
    %v82 = vld [vmem:[#allocation2 + $0x90] sm:$0xff]
    %v83 = vld [vmem:[#allocation2 + $0x98] sm:$0xff]
    %v84 = vld [vmem:[#allocation2 + $0xa0] sm:$0xff]
    %v85 = vld [vmem:[#allocation2 + $0xa8] sm:$0xff]
    %v86 = vld [vmem:[#allocation2 + $0xb0] sm:$0xff]
    %v87 = vld [vmem:[#allocation2 + $0xb8] sm:$0xff]
    %v88 = vld [vmem:[#allocation2 + $0xc0] sm:$0xff]
    %v89 = vld [vmem:[#allocation2 + $0xc8] sm:$0xff]
    %v90 = vld [vmem:[#allocation2 + $0xd0] sm:$0xff]
    %v91 = vld [vmem:[#allocation2 + $0xd8] sm:$0xff]
    %v92 = vld [vmem:[#allocation2 + $0xe0] sm:$0xff]
    %v93 = vld [vmem:[#allocation2 + $0xe8] sm:$0xff]
    %v94 = vld [vmem:[#allocation2 + $0xf0] sm:$0xff]
    %v95 = vld [vmem:[#allocation2 + $0xf8] sm:$0xff]
    %v96 = vld [vmem:[#allocation2 + $0x100] sm:$0xff]
    %v97 = vld [vmem:[#allocation2 + $0x108] sm:$0xff]
    %v98 = vld [vmem:[#allocation2 + $0x110] sm:$0xff]
    %v99 = vld [vmem:[#allocation2 + $0x118] sm:$0xff]
    %v100 = vld [vmem:[#allocation2 + $0x120] sm:$0xff]
    %v101 = vld [vmem:[#allocation2 + $0x128] sm:$0xff]
    %v102 = vld [vmem:[#allocation2 + $0x130] sm:$0xff]
    %v103 = vld [vmem:[#allocation2 + $0x138] sm:$0xff]
    %v104 = vld [vmem:[#allocation2 + $0x140] sm:$0xff]
    %v105 = vld [vmem:[#allocation2 + $0x148] sm:$0xff]
    %v106 = vld [vmem:[#allocation2 + $0x150] sm:$0xff]
    %v107 = vld [vmem:[#allocation2 + $0x158] sm:$0xff]
    %v108 = vld [vmem:[#allocation2 + $0x160] sm:$0xff]
    %v109 = vld [vmem:[#allocation2 + $0x168] sm:$0xff]
    %v110 = vld [vmem:[#allocation2 + $0x170] sm:$0xff]
    %v111 = vld [vmem:[#allocation2 + $0x178] sm:$0xff]
    %v112 = vld [vmem:[#allocation2 + $0x180] sm:$0xff]
    %v113 = vld [vmem:[#allocation2 + $0x188] sm:$0xff]
    %v114 = vld [vmem:[#allocation2 + $0x190] sm:$0xff]
    %v115 = vld [vmem:[#allocation2 + $0x198] sm:$0xff]
    %v116 = vld [vmem:[#allocation2 + $0x1a0] sm:$0xff]
    %v117 = vld [vmem:[#allocation2 + $0x1a8] sm:$0xff]
    %v118 = vld [vmem:[#allocation2 + $0x1b0] sm:$0xff]
    %v119 = vld [vmem:[#allocation2 + $0x1b8] sm:$0xff]
    %v120 = vld [vmem:[#allocation2 + $0x1c0] sm:$0xff]
    %v121 = vld [vmem:[#allocation2 + $0x1c8] sm:$0xff]
    %v122 = vld [vmem:[#allocation2 + $0x1d0] sm:$0xff]
    %v123 = vld [vmem:[#allocation2 + $0x1d8] sm:$0xff]
    %v124 = vld [vmem:[#allocation2 + $0x1e0] sm:$0xff]
    %v125 = vld [vmem:[#allocation2 + $0x1e8] sm:$0xff]
    %v126 = vld [vmem:[#allocation2 + $0x1f0] sm:$0xff]
    %v127 = vld [vmem:[#allocation2 + $0x1f8] sm:$0xff]
    %128 = vmatpush.msra.mxu0 %v94
    %129 = vmatpush.msra.mxu0 %v92
    %130 = vmatpush.msra.mxu0 %v90
    %131 = vmatpush.msra.mxu0 %v88
    %132 = vmatpush.msra.mxu0 %v86
    %133 = vmatpush.msra.mxu0 %v84
    %134 = vmatpush.msra.mxu0 %v82
    %135 = vmatpush.msra.mxu0 %v80
    %136 = vmatpush.msra.mxu0 %v78
    %137 = vmatpush.msra.mxu0 %v76
    %138 = vmatpush.msra.mxu0 %v74
    %139 = vmatpush.msra.mxu0 %v72
    %140 = vmatpush.msra.mxu0 %v70
    %141 = vmatpush.msra.mxu0 %v68
    %142 = vmatpush.msra.mxu0 %v66
    %143 = vmatpush.msra.mxu0 %v64
    %144 = vmatmul.f32.gmra.mxu0 %v62
    %v145 = vpop.f32.mrf.mxu0
    %v146 = vadd.f32 0.0, %v145
    %147 = vdwg.mxu0
    %148 = vmatpush.msra.mxu0 %v126
    %149 = vmatpush.msra.mxu0 %v124
    %150 = vmatpush.msra.mxu0 %v122
    %151 = vmatpush.msra.mxu0 %v120
    %152 = vmatpush.msra.mxu0 %v118
    %153 = vmatpush.msra.mxu0 %v116
    %154 = vmatpush.msra.mxu0 %v114
    %155 = vmatpush.msra.mxu0 %v112
    %156 = vmatpush.msra.mxu0 %v110
    %157 = vmatpush.msra.mxu0 %v108
    %158 = vmatpush.msra.mxu0 %v106
    %159 = vmatpush.msra.mxu0 %v104
    %160 = vmatpush.msra.mxu0 %v102
    %161 = vmatpush.msra.mxu0 %v100
    %162 = vmatpush.msra.mxu0 %v98
    %163 = vmatpush.msra.mxu0 %v96
    %164 = vmatmul.f32.gmra.mxu0 %v63
    %v165 = vpop.f32.mrf.mxu0
    %v166 = vadd.f32 %v146, %v165
    %167 = vdwg.mxu0
    %168 = vmatpush.msra.mxu0 %v95
    %169 = vmatpush.msra.mxu0 %v93
    %170 = vmatpush.msra.mxu0 %v91
    %171 = vmatpush.msra.mxu0 %v89
    %172 = vmatpush.msra.mxu0 %v87
    %173 = vmatpush.msra.mxu0 %v85
    %174 = vmatpush.msra.mxu0 %v83
    %175 = vmatpush.msra.mxu0 %v81
    %176 = vmatpush.msra.mxu0 %v79
    %177 = vmatpush.msra.mxu0 %v77
    %178 = vmatpush.msra.mxu0 %v75
    %179 = vmatpush.msra.mxu0 %v73
    %180 = vmatpush.msra.mxu0 %v71
    %181 = vmatpush.msra.mxu0 %v69
    %182 = vmatpush.msra.mxu0 %v67
    %183 = vmatpush.msra.mxu0 %v65
    %184 = vmatmul.f32.gmra.mxu0 %v62
    %v185 = vpop.f32.mrf.mxu0
    %v186 = vadd.f32 0.0, %v185
    %187 = vdwg.mxu0
    %188 = vmatpush.msra.mxu0 %v127
    %189 = vmatpush.msra.mxu0 %v125
    %190 = vmatpush.msra.mxu0 %v123
    %191 = vmatpush.msra.mxu0 %v121
    %192 = vmatpush.msra.mxu0 %v119
    %193 = vmatpush.msra.mxu0 %v117
    %194 = vmatpush.msra.mxu0 %v115
    %195 = vmatpush.msra.mxu0 %v113
    %196 = vmatpush.msra.mxu0 %v111
    %197 = vmatpush.msra.mxu0 %v109
    %198 = vmatpush.msra.mxu0 %v107
    %199 = vmatpush.msra.mxu0 %v105
    %200 = vmatpush.msra.mxu0 %v103
    %201 = vmatpush.msra.mxu0 %v101
    %202 = vmatpush.msra.mxu0 %v99
    %203 = vmatpush.msra.mxu0 %v97
    %204 = vmatmul.f32.gmra.mxu0 %v63
    %v205 = vpop.f32.mrf.mxu0
    %v206 = vadd.f32 %v186, %v205
    %207 = vdwg.mxu0
    %v208 = vmul.f32 %v166, %v62
    %v209 = vmul.f32 %v206, %v63
    %v210 = vadd.f32 %v208, %v209
    %211 = vadd.xlane.f32.xlu0 %v210
    %v212 = vpop.xlane.xlu0 %211
    %v213 = vmax.f32 %v212, 0.0
    %v214 = vmul.f32 %v213, 0.00390625
    %v215 = vrsqrt.pop %v214
    %v216 = vmul.f32 %v215, %v214
    %v217 = vmul.f32 %v216, %v215
    %v218 = vmul.f32 0.5, %v217
    %v219 = vsub.f32 1.5, %v218
    %v220 = vmul.f32 %v215, %v219
    %v221 = vmul.f32 %v214, %v220
    %vm222 = vcmp.eq.f32.partialorder %v214, inf
    %v223 = vsel %vm222, %v214, %v221
    %vm224 = vcmp.eq.f32.partialorder %v214, 0.0
    %v225 = vand.u32 %v214, 2147483648
    %v226 = vsel %vm224, %v225, %v223
    %vm227 = vcmask 7168
    %v228 = vsel %vm227, %v226, 0.0
    %229 = vadd.xlane.f32.xlu0 %v228
    %v230 = vpop.xlane.xlu0 %229
    %v231 = vrot.slane %v230, 4
    %v232 = vadd.f32 %v230, %v231
    %v233 = vrot.slane %v232, 2
    %v234 = vadd.f32 %v232, %v233
    %v235 = vrot.slane %v234, 1
    %v236 = vadd.f32 %v234, %v235
    %s237 = vtos %v236
    %v238 = vlaneseq
    %v239 = vand.u32 %v238, 127
    %vm240 = vcmp.eq.s32.totalorder %v239, 0
    %v241 = vstv %s237
    %v242 = vsel %vm240, %v241, 0.0
    %243 = vst [vmem:[#allocation8] sm:$0x1] %v242
    // Predicated region
    $region26: #{tpu_custom_call.1} parent=1 // pred_check
      _
    $region27: #{tpu_custom_call.1} parent=1 // pred_check_branch
      %245 = sbr.rel (0) target = $region29
    $region28: #{tpu_custom_call.1} parent=1 // pred_region
      %247 = vsyncadd [#allocation4], 0
      %s249 = sshll.u32 [#allocation8], 4
      %s250 = int_to_ptr.vmem [resolvable:$true] %s249
      %s251 = sshll.u32 %s3, 4
      %s252 = int_to_ptr.hbm [resolvable:$true] %s251
      %254 = dma.vmem_to_hbm [thread:$0]  %s250, 16, %s252, [#allocation4]
    $region29: #{tpu_custom_call.1} parent=1 // pred_fallthru
      _
    // Predicated region
    $region30: #{tpu_custom_call.1} parent=1 // pred_check
      _
    $region31: #{tpu_custom_call.1} parent=1 // pred_check_branch
      %256 = sbr.rel (0) target = $region33
    $region32: #{tpu_custom_call.1} parent=1 // pred_region
      %258 = dma.done [#allocation4], 16
    $region33: #{tpu_custom_call.1} parent=1 // pred_fallthru
      _
    %259 = vsyncpa [#allocation3], 1
    %260 = vsyncpa [#allocation6], 1
    %261 = vsyncpa [#allocation4], 1

</llo_original>
